<compile_context>
chip_gen: v6e
topology: v6e:2x2x1
jax: 0.10.0
libtpu: 0.0.40
codegen_flags: <defaults>
</compile_context>

<pallas_src>
import jax
import jax.numpy as jnp
from jax.experimental import pallas as pl
from jax.experimental.pallas import tpu as pltpu


def _linear_embedding_kernel(x_ref, w_ref, pos_ref, out_ref):
    # x_ref:   (tm, F)  flattened patch rows (bb whole sequences)
    # w_ref:   (F, D)   projection weight (constant index_map -> resident)
    # pos_ref: (tm, D)  precomputed (pos_embedding[1:] + bias) tiled bb times (constant)
    # out_ref: (tm, D)
    proj = jnp.dot(x_ref[...], w_ref[...],
                   preferred_element_type=jnp.float32)     # MXU, f32 accumulate
    out_ref[...] = (proj + pos_ref[...].astype(jnp.float32)).astype(out_ref.dtype)


def _choose_row_tile(B, N, target_rows=512):
    """Pick tm = bb*N: bb divides B, tm sublane-aligned, aim ~target_rows, keep >=2 tiles."""
    rows = B * N
    bb = max(1, min(B, max(1, target_rows // max(N, 1))))
    if B > 1:
        bb = min(bb, max(1, B // 2))       # keep the parallel grid axis >= 2 when possible
    while B % bb != 0:
        bb -= 1
    tm = bb * N
    if tm != rows and tm % 8 != 0:
        bb, tm = B, rows                   # fallback: single full-array block (always legal)
    return bb, tm


def linear_embedding(patch, proj_w, proj_b, class_token, pos_embedding,
                     compute_dtype=None):
    """patch: (B, N, F); proj_w: (F, D); proj_b: (D,);
    class_token: (1, D); pos_embedding: (N+1, D)  ->  (B, N+1, D).

    compute_dtype: optionally cast patch/proj_w (e.g. jnp.bfloat16 on v6e/v7x) —
    accumulation and elementwise adds stay f32."""
    B, N, F = patch.shape
    D = proj_w.shape[1]
    out_dtype = patch.dtype

    # ---- wrapper-side precompute of batch-invariant terms (f32 adds) ----
    pos_f32 = pos_embedding.astype(jnp.float32)
    ct_row = (class_token.astype(jnp.float32) + pos_f32[0:1]).astype(out_dtype)   # (1, D)
    pos_pb = pos_f32[1:] + proj_b.astype(jnp.float32)[None, :]                    # (N, D)

    bb, tm = _choose_row_tile(B, N)
    rows = B * N
    num_tiles = rows // tm

    x_flat = patch.reshape(rows, F)
    w = proj_w
    if compute_dtype is not None:
        x_flat = x_flat.astype(compute_dtype)
        w = w.astype(compute_dtype)
    pos_tile = jnp.tile(pos_pb, (bb, 1))                                          # (tm, D) f32

    itemsize = jnp.dtype(x_flat.dtype).itemsize
    vmem_bytes = (2 * tm * F + F * D) * itemsize + (tm * D + 2 * tm * D) * 4
    vmem_limit = int(min(96 * 1024 * 1024, max(2 * vmem_bytes, 4 * 1024 * 1024)))

    cost = pl.CostEstimate(
        flops=2 * rows * F * D,
        transcendentals=0,
        bytes_accessed=(rows * F + F * D + tm * D) * itemsize + rows * D * jnp.dtype(out_dtype).itemsize,
    )

    proj_rows = pl.pallas_call(
        _linear_embedding_kernel,
        out_shape=jax.ShapeDtypeStruct((rows, D), out_dtype),
        grid_spec=pltpu.PrefetchScalarGridSpec(
            num_scalar_prefetch=0,
            grid=(num_tiles,),
            in_specs=[
                pl.BlockSpec((tm, F), lambda i: (i, 0)),   # patch rows (pipelined)
                pl.BlockSpec((F, D), lambda i: (0, 0)),    # weight (resident)
                pl.BlockSpec((tm, D), lambda i: (0, 0)),   # pos+bias tile (resident)
            ],
            out_specs=pl.BlockSpec((tm, D), lambda i: (i, 0)),
        ),
        compiler_params=pltpu.CompilerParams(
            dimension_semantics=("parallel",),
            vmem_limit_bytes=vmem_limit,
        ),
        cost_estimate=cost,
    )(x_flat, w, pos_tile)                                                        # (B*N, D)

    # ---- assemble final (B, N+1, D): class-token row (batch-invariant) + projected rows
    proj_rows = proj_rows.reshape(B, N, D)
    ct = jnp.broadcast_to(ct_row[None, :, :], (B, 1, D)).astype(out_dtype)
    return jnp.concatenate([ct, proj_rows], axis=1)


def linear_embedding_ref(patch, proj_w, proj_b, class_token, pos_embedding):
    B = patch.shape[0]
    proj = jnp.einsum("bnf,fd->bnd", patch, proj_w) + proj_b
    ct = jnp.broadcast_to(class_token[None, :, :], (B, 1, proj.shape[-1]))
    seq = jnp.concatenate([ct, proj], axis=1)
    return seq + pos_embedding[None, :, :]


if __name__ == "__main__":
    # Small shapes consistent with the module: B=2, num_patches=8, F=32, D=32.
    B, N, F, D = 2, 8, 32, 32

    key = jax.random.PRNGKey(0)
    k_patch, k_w, k_b, k_ct, k_pos = jax.random.split(key, 5)

    patch = jax.random.normal(k_patch, (B, N, F), dtype=jnp.float32)
    # Deterministic parameter init (shapes per nn.Linear / nn.Parameter / nn.Embedding).
    proj_w = jax.random.normal(k_w, (F, D), dtype=jnp.float32) * 0.02   # (in, out)
    proj_b = jax.random.normal(k_b, (D,), dtype=jnp.float32) * 0.02
    class_token = jax.random.normal(k_ct, (1, D), dtype=jnp.float32)
    pos_embedding = jax.random.normal(k_pos, (N + 1, D), dtype=jnp.float32)

    out = linear_embedding(patch, proj_w, proj_b, class_token, pos_embedding)
    out = jax.block_until_ready(out)

    ref = linear_embedding_ref(patch, proj_w, proj_b, class_token, pos_embedding)
    assert out.shape == (B, N + 1, D), out.shape
    assert jnp.allclose(out, ref, atol=1e-5, rtol=1e-5), "mismatch vs reference"

    print("KERNEL_OK")
</pallas_src>

<mosaic_0001>
module attributes {stable_mosaic.version = 11 : i64} {
  func.func @_linear_embedding_kernel(%arg0: i32, %arg1: memref<8x32xf32, #tpu.memory_space<vmem>>, %arg2: memref<32x32xf32, #tpu.memory_space<vmem>>, %arg3: memref<8x32xf32, #tpu.memory_space<vmem>>, %arg4: memref<8x32xf32, #tpu.memory_space<vmem>>) attributes {dimension_semantics = [#tpu.dimension_semantics<parallel>], iteration_bounds = array<i64: 2>, scalar_prefetch = 0 : i64, scratch_operands = 0 : i64, tpu.core_type = #tpu.core_type<tc>, window_params = [{transform_indices = @transform_0, window_bounds = array<i64: 8, 32>}, {pipeline_mode = #tpu.pipeline_mode<synchronous>, transform_indices = @transform_1, window_bounds = array<i64: 32, 32>}, {pipeline_mode = #tpu.pipeline_mode<synchronous>, transform_indices = @transform_2, window_bounds = array<i64: 8, 32>}, {transform_indices = @transform_3, window_bounds = array<i64: 8, 32>}]} {
    %c0 = arith.constant 0 : index
    %c0_0 = arith.constant 0 : index
    %0 = vector.load %arg1[%c0, %c0_0] : memref<8x32xf32, #tpu.memory_space<vmem>>, vector<8x32xf32>
    %c0_1 = arith.constant 0 : index
    %c0_2 = arith.constant 0 : index
    %1 = vector.load %arg2[%c0_1, %c0_2] : memref<32x32xf32, #tpu.memory_space<vmem>>, vector<32x32xf32>
    %cst = arith.constant dense<0.000000e+00> : vector<8x32xf32>
    %2 = tpu.matmul %0, %1, %cst {dimension_numbers = #tpu.dot_dimension_numbers<[1], [0], [0], [1], [0, 0, 1, 1], [], []>} : vector<8x32xf32>, vector<32x32xf32>, vector<8x32xf32> -> vector<8x32xf32>
    %c0_3 = arith.constant 0 : index
    %c0_4 = arith.constant 0 : index
    %3 = vector.load %arg3[%c0_3, %c0_4] : memref<8x32xf32, #tpu.memory_space<vmem>>, vector<8x32xf32>
    %4 = arith.addf %2, %3 : vector<8x32xf32>
    %c0_5 = arith.constant 0 : index
    %c0_6 = arith.constant 0 : index
    %5 = vector.load %arg4[%c0_5, %c0_6] : memref<8x32xf32, #tpu.memory_space<vmem>>, vector<8x32xf32>
    tpu.vector_store %arg4[%c0_5, %c0_6], %4 {strides = array<i32>} : memref<8x32xf32, #tpu.memory_space<vmem>>, vector<8x32xf32>,
    return
  }
  func.func @transform_0(%arg0: i32) -> (i32, i32) {
    %c0_i32 = arith.constant 0 : i32
    %c0_i32_0 = arith.constant 0 : i32
    return %arg0, %c0_i32 : i32, i32
  }
  func.func @transform_1(%arg0: i32) -> (i32, i32) {
    %c0_i32 = arith.constant 0 : i32
    %c0_i32_0 = arith.constant 0 : i32
    %c0_i32_1 = arith.constant 0 : i32
    return %c0_i32, %c0_i32_0 : i32, i32
  }
  func.func @transform_2(%arg0: i32) -> (i32, i32) {
    %c0_i32 = arith.constant 0 : i32
    %c0_i32_0 = arith.constant 0 : i32
    %c0_i32_1 = arith.constant 0 : i32
    return %c0_i32, %c0_i32_0 : i32, i32
  }
  func.func @transform_3(%arg0: i32) -> (i32, i32) {
    %c0_i32 = arith.constant 0 : i32
    %c0_i32_0 = arith.constant 0 : i32
    return %arg0, %c0_i32 : i32, i32
  }
}

</mosaic_0001>

<llo_original>
// kernel: tpu_custom_call.1
$region0: #{tpu_custom_call.1}
  #allocation0 [shape = 'u32[]', space=smem, size = 0x4, offset = 0x4, fixed_abs, tag = 'smem constant byte address 0x4 - core index']
  #allocation1 [shape = 'u32[144,128]{1,0:T(1,128)}', space=vmem, size = 0x12000, scoped, tag = 'internal scratch']
  %s0 = inlined_call_operand.hbm [shape: f32[16,32], index: 0, kind: input, shape index: {}]
  %s1 = inlined_call_operand.hbm [shape: f32[32,32], index: 1, kind: input, shape index: {}]
  %s2 = inlined_call_operand.hbm [shape: f32[8,32], index: 2, kind: input, shape index: {}]
  %s3 = inlined_call_operand.hbm [shape: f32[16,32], index: 3, kind: output, shape index: {}]
  %s4 = sld [smem:[#allocation0]]
  $region57: #{tpu_custom_call.1} parent=0
    _
  %s6 = ssub.s32 1, %s4
  %s7 = scalar_select 0, %s6, %s4
  $region1: #{tpu_custom_call.1} parent=0
    #allocation2 [shape = 'u8[8192]{0}', space=vmem, size = 0x2000, scoped, tag = 'input window, operand 0']
    #allocation3 [shape = 's32[2]{0}', space=sflag, size = 0x8, scoped, tag = 'scoped memory for tpu_custom_call.1']
    #allocation4 [shape = 's32[2]{0}', space=sflag, size = 0x8, scoped, tag = 'scoped memory for tpu_custom_call.1']
    #allocation5 [shape = 'u8[16384]{0}', space=vmem, size = 0x4000, scoped, tag = 'input window, operand 1, single buffered']
    #allocation6 [shape = 's32[1]{0}', space=sflag, size = 0x4, scoped, tag = 'scoped memory for tpu_custom_call.1']
    #allocation7 [shape = 'u8[4096]{0}', space=vmem, size = 0x1000, scoped, tag = 'input window, operand 2, single buffered']
    #allocation8 [shape = 'u8[8192]{0}', space=vmem, size = 0x2000, scoped, tag = 'output window, operand 0']
    %8 = vsyncpa [#allocation3], 0
    %s9 = scalar_lea.sflag [#allocation3], 1
    %10 = vsyncpa %s9, 0
    %11 = vsyncpa [#allocation6], 0
    %12 = vsyncpa [#allocation4], 0
    %s13 = scalar_lea.sflag [#allocation4], 1
    %14 = vsyncpa %s13, 0
    loop: start=0, step=1, limit=4
    $region2: #{tpu_custom_call.1} parent=1 // loop_pre_header
      _
    $region3: #{tpu_custom_call.1} parent=1 // loop_header
      %s16 = sphi 0, %s20
      %p17 = scmp.ge.s32.totalorder %s16, 4
      %s26 = sphi 0, %s28
      %s29 = sphi 0, %s26
      %s30 = sphi 0, %s29
      %s46 = sphi 0, %s30
      %s50 = sphi 0, %s50
      %s52 = sphi 0, %s50
      %s53 = sphi 0, %s52
      %s67 = sphi 0, %s53
      %s71 = sphi 0, %s71
      %s73 = sphi 0, %s71
      %s74 = sphi 0, %s73
      %s88 = sphi 0, %s74
      %s94 = sphi 0, %s96
      %s97 = sphi 0, %s94
      %s98 = sphi 0, %s97
      %s114 = sphi 0, %s98
    $region4: #{tpu_custom_call.1} parent=1 // loop_header_branch
      %19 = sbr.rel (%p17) target = $region8
    $region5: #{tpu_custom_call.1} parent=1 // loop_body
      %s21 = ssub.s32 %s16, 1
      %s22 = ssub.s32 %s16, 2
      %s23 = sadd.s32 %s16, 1
      %s24 = ssub.s32 %s16, %s23
      %p25 = scmp.eq.s32.totalorder %s24, 0
      %s27 = sadd.s32 %s26, 1
      %s28 = scalar_select %p25, %s26, %s27
      %p31 = pneg %p25
      %p32 = scmp.eq.s32.totalorder %s16, 1
      %p33 = por %p31, %p32
      %p34 = scmp.ne.s32.totalorder %s26, %s29
      %p35 = scmp.eq.s32.totalorder %s16, 0
      %p36 = por %p34, %p35
      %p37 = scmp.ne.s32.totalorder %s26, %s29
      %p38 = scmp.eq.s32.totalorder %s21, 1
      %p39 = por %p37, %p38
      %p40 = scmp.ne.s32.totalorder %s29, %s30
      %p41 = scmp.eq.s32.totalorder %s21, 0
      %p42 = por %p40, %p41
      %p43 = scmp.ne.s32.totalorder %s29, %s30
      %p44 = scmp.eq.s32.totalorder %s22, 1
      %p45 = por %p43, %p44
      %p47 = scmp.ne.s32.totalorder %s30, %s46
      %p48 = scmp.eq.s32.totalorder %s22, 0
      %p49 = por %p47, %p48
      %s51 = sadd.s32 %s50, 1
      %p54 = scmp.eq.s32.totalorder %s16, 1
      %p55 = scmp.ne.s32.totalorder %s50, %s52
      %p56 = scmp.eq.s32.totalorder %s16, 0
      %p57 = por %p55, %p56
      %p58 = scmp.ne.s32.totalorder %s50, %s52
      %p59 = scmp.eq.s32.totalorder %s21, 1
      %p60 = por %p58, %p59
      %p61 = scmp.ne.s32.totalorder %s52, %s53
      %p62 = scmp.eq.s32.totalorder %s21, 0
      %p63 = por %p61, %p62
      %p64 = scmp.ne.s32.totalorder %s52, %s53
      %p65 = scmp.eq.s32.totalorder %s22, 1
      %p66 = por %p64, %p65
      %p68 = scmp.ne.s32.totalorder %s53, %s67
      %p69 = scmp.eq.s32.totalorder %s22, 0
      %p70 = por %p68, %p69
      %s72 = sadd.s32 %s71, 1
      %p75 = scmp.eq.s32.totalorder %s16, 1
      %p76 = scmp.ne.s32.totalorder %s71, %s73
      %p77 = scmp.eq.s32.totalorder %s16, 0
      %p78 = por %p76, %p77
      %p79 = scmp.ne.s32.totalorder %s71, %s73
      %p80 = scmp.eq.s32.totalorder %s21, 1
      %p81 = por %p79, %p80
      %p82 = scmp.ne.s32.totalorder %s73, %s74
      %p83 = scmp.eq.s32.totalorder %s21, 0
      %p84 = por %p82, %p83
      %p85 = scmp.ne.s32.totalorder %s73, %s74
      %p86 = scmp.eq.s32.totalorder %s22, 1
      %p87 = por %p85, %p86
      %p89 = scmp.ne.s32.totalorder %s74, %s88
      %p90 = scmp.eq.s32.totalorder %s22, 0
      %p91 = por %p89, %p90
      %s92 = ssub.s32 %s16, %s23
      %p93 = scmp.eq.s32.totalorder %s92, 0
      %s95 = sadd.s32 %s94, 1
      %s96 = scalar_select %p93, %s94, %s95
      %p99 = pneg %p93
      %p100 = scmp.eq.s32.totalorder %s16, 1
      %p101 = por %p99, %p100
      %p102 = scmp.ne.s32.totalorder %s94, %s97
      %p103 = scmp.eq.s32.totalorder %s16, 0
      %p104 = por %p102, %p103
      %p105 = scmp.ne.s32.totalorder %s94, %s97
      %p106 = scmp.eq.s32.totalorder %s21, 1
      %p107 = por %p105, %p106
      %p108 = scmp.ne.s32.totalorder %s97, %s98
      %p109 = scmp.eq.s32.totalorder %s21, 0
      %p110 = por %p108, %p109
      %p111 = scmp.ne.s32.totalorder %s97, %s98
      %p112 = scmp.eq.s32.totalorder %s22, 1
      %p113 = por %p111, %p112
      %p115 = scmp.ne.s32.totalorder %s98, %s114
      %p116 = scmp.eq.s32.totalorder %s22, 0
      %p117 = por %p115, %p116
      %p118 = scmp.le.s32.totalorder 1, %s16
      %p119 = scmp.lt.s32.totalorder %s16, 3
      %p120 = pnand %p118, %p119
      %p121 = pneg %p120
      // Predicated region
      $region9: #{tpu_custom_call.1} parent=5 // pred_check
        _
      $region10: #{tpu_custom_call.1} parent=5 // pred_check_branch
        %123 = sbr.rel (%p120) target = $region12
      $region11: #{tpu_custom_call.1} parent=5 // pred_region
        %s124 = ssub.s32 %s16, 1
        // Predicated region
        $region13: #{tpu_custom_call.1} parent=11 // pred_check
          %p125 = pneg %p63
        $region14: #{tpu_custom_call.1} parent=11 // pred_check_branch
          %127 = sbr.rel (%p125) target = $region16
        $region15: #{tpu_custom_call.1} parent=11 // pred_region
          %s129 = ssub.s32 512, 512
          %130 = vsyncadd [#allocation6], %s129
          %s131 = sshll.u32 [#allocation5], 4
          %s132 = int_to_ptr.vmem [resolvable:$true] %s131
          %137 = dma.hbm_to_vmem [thread:$0]  %s1, 512, %s132, [#allocation6], 128, 128, 8
        $region16: #{tpu_custom_call.1} parent=11 // pred_fallthru
          _
        // Predicated region
        $region17: #{tpu_custom_call.1} parent=11 // pred_check
          %p138 = pneg %p84
        $region18: #{tpu_custom_call.1} parent=11 // pred_check_branch
          %140 = sbr.rel (%p138) target = $region20
        $region19: #{tpu_custom_call.1} parent=11 // pred_region
          %s142 = ssub.s32 128, 128
          %143 = vsyncadd [#allocation6], %s142
          %s145 = sshll.u32 [#allocation7], 4
          %s146 = int_to_ptr.vmem [resolvable:$true] %s145
          %148 = dma.hbm_to_vmem [thread:$0]  %s2, 128, %s146, [#allocation6]
        $region20: #{tpu_custom_call.1} parent=11 // pred_fallthru
          _
      $region12: #{tpu_custom_call.1} parent=5 // pred_fallthru
        _
      %p149 = scmp.lt.s32.totalorder %s16, 2
      // Predicated region
      $region21: #{tpu_custom_call.1} parent=5 // pred_check
        %p150 = pneg %p149
      $region22: #{tpu_custom_call.1} parent=5 // pred_check_branch
        %152 = sbr.rel (%p150) target = $region24
      $region23: #{tpu_custom_call.1} parent=5 // pred_region
        // Predicated region
        $region25: #{tpu_custom_call.1} parent=23 // pred_check
          %p153 = pneg %p36
        $region26: #{tpu_custom_call.1} parent=23 // pred_check_branch
          %155 = sbr.rel (%p153) target = $region28
        $region27: #{tpu_custom_call.1} parent=23 // pred_region
          %s156 = sand.u32 %s26, 1
          %s157 = scalar_lea.sflag [#allocation3], %s156
          %s158 = sand.u32 %s26, 1
          %s159 = smul.addr %s158, 8
          %s160 = scalar_lea.vmem [#allocation2], %s159
          %s162 = ssub.s32 128, 128
          %163 = vsyncadd %s157, %s162
          %s164 = smul.addr %s16, 128
          %s165 = scalar_lea.hbm %s0, %s164
          %s167 = sshll.u32 %s160, 4
          %s168 = int_to_ptr.vmem [resolvable:$true] %s167
          %170 = dma.hbm_to_vmem [thread:$0]  %s165, 128, %s168, %s157
        $region28: #{tpu_custom_call.1} parent=23 // pred_fallthru
          _
      $region24: #{tpu_custom_call.1} parent=5 // pred_fallthru
        _
      %p171 = scmp.le.s32.totalorder 1, %s16
      %p172 = scmp.lt.s32.totalorder %s16, 3
      %p173 = pnand %p171, %p172
      %p174 = pneg %p173
      // Predicated region
      $region29: #{tpu_custom_call.1} parent=5 // pred_check
        _
      $region30: #{tpu_custom_call.1} parent=5 // pred_check_branch
        %176 = sbr.rel (%p173) target = $region32
      $region31: #{tpu_custom_call.1} parent=5 // pred_region
        %s177 = ssub.s32 %s16, 1
        %s178 = sand.u32 %s29, 1
        %s179 = scalar_lea.sflag [#allocation3], %s178
        %s180 = sand.u32 %s29, 1
        %s181 = smul.addr %s180, 8
        %s182 = scalar_lea.vmem [#allocation2], %s181
        // Predicated region
        $region33: #{tpu_custom_call.1} parent=31 // pred_check
          %p183 = pneg %p42
        $region34: #{tpu_custom_call.1} parent=31 // pred_check_branch
          %185 = sbr.rel (%p183) target = $region36
        $region35: #{tpu_custom_call.1} parent=31 // pred_region
          %186 = dma.done %s179, 128
        $region36: #{tpu_custom_call.1} parent=31 // pred_fallthru
          _
        // Predicated region
        $region37: #{tpu_custom_call.1} parent=31 // pred_check
          %p187 = pneg %p63
        $region38: #{tpu_custom_call.1} parent=31 // pred_check_branch
          %189 = sbr.rel (%p187) target = $region40
        $region39: #{tpu_custom_call.1} parent=31 // pred_region
          %190 = dma.done [#allocation6], 512
        $region40: #{tpu_custom_call.1} parent=31 // pred_fallthru
          _
        // Predicated region
        $region41: #{tpu_custom_call.1} parent=31 // pred_check
          %p191 = pneg %p84
        $region42: #{tpu_custom_call.1} parent=31 // pred_check_branch
          %193 = sbr.rel (%p191) target = $region44
        $region43: #{tpu_custom_call.1} parent=31 // pred_region
          %194 = dma.done [#allocation6], 128
        $region44: #{tpu_custom_call.1} parent=31 // pred_fallthru
          _
        %s195 = sand.u32 %s29, 1
        %s196 = scalar_lea.sflag [#allocation3], %s195
        %s197 = sand.u32 %s29, 1
        %s198 = smul.addr %s197, 8
        %s199 = scalar_lea.vmem [#allocation2], %s198
        %p200 = pneg %p42
        %p201 = pneg %p39
        %p202 = pneg %p63
        %p203 = pneg %p60
        %p204 = pneg %p84
        %p205 = pneg %p81
        %p206 = pneg %p110
        %p207 = pneg %p107
        %s208 = sand.u32 %s97, 1
        %s209 = scalar_lea.sflag [#allocation4], %s208
        %s210 = sand.u32 %s97, 1
        %s211 = smul.addr %s210, 8
        %s212 = scalar_lea.vmem [#allocation8], %s211
        %v213 = vld [vmem:[%s182] sm:$0xff]
        %v214 = vld [vmem:[#allocation5] sm:$0xff]
        %v215 = vld [vmem:[#allocation5 + $0x8] sm:$0xff]
        %v216 = vld [vmem:[#allocation5 + $0x10] sm:$0xff]
        %v217 = vld [vmem:[#allocation5 + $0x18] sm:$0xff]
        %v218 = vld [vmem:[#allocation7] sm:$0xff]
        %vm219 = vcmask 261120
        %v221 = vsel %vm219, %v213, 0
        %223 = vmatprep.subr.mxu0 0.0
        %224 = vmatpush1.msra.mxu0 0.0
        %225 = vmatprep.subr.mxu0 0.0
        %226 = vmatpush1.msra.mxu0 0.0
        %227 = vmatprep.subr.mxu0 0.0
        %228 = vmatpush1.msra.mxu0 0.0
        %229 = vmatprep.subr.mxu0 0.0
        %230 = vmatpush1.msra.mxu0 0.0
        %231 = vmatprep.subr.mxu0 0.0
        %232 = vmatpush1.msra.mxu0 0.0
        %233 = vmatprep.subr.mxu0 0.0
        %234 = vmatpush1.msra.mxu0 0.0
        %235 = vmatprep.subr.mxu0 0.0
        %236 = vmatpush1.msra.mxu0 0.0
        %237 = vmatprep.subr.mxu0 0.0
        %238 = vmatpush1.msra.mxu0 0.0
        %239 = vmatprep.subr.mxu0 0.0
        %240 = vmatpush1.msra.mxu0 0.0
        %241 = vmatprep.subr.mxu0 0.0
        %242 = vmatpush1.msra.mxu0 0.0
        %243 = vmatprep.subr.mxu0 0.0
        %244 = vmatpush1.msra.mxu0 0.0
        %245 = vmatprep.subr.mxu0 0.0
        %246 = vmatpush1.msra.mxu0 0.0
        %247 = vmatprep.subr.mxu0 0.0
        %248 = vmatpush1.msra.mxu0 %v217
        %249 = vmatprep.subr.mxu0 0.0
        %250 = vmatpush1.msra.mxu0 %v216
        %251 = vmatprep.subr.mxu0 0.0
        %252 = vmatpush1.msra.mxu0 %v215
        %253 = vmatprep.subr.mxu0 0.0
        %254 = vmatpush1.msra.mxu0 %v214
        %255 = vmatprep.subr.mxu0 0.0
        %256 = vmatpush2.msra.mxu0 0.0
        %257 = vmatprep.subr.mxu0 0.0
        %258 = vmatpush2.msra.mxu0 0.0
        %259 = vmatprep.subr.mxu0 0.0
        %260 = vmatpush2.msra.mxu0 0.0
        %261 = vmatprep.subr.mxu0 0.0
        %262 = vmatpush2.msra.mxu0 0.0
        %263 = vmatprep.subr.mxu0 0.0
        %264 = vmatpush2.msra.mxu0 0.0
        %265 = vmatprep.subr.mxu0 0.0
        %266 = vmatpush2.msra.mxu0 0.0
        %267 = vmatprep.subr.mxu0 0.0
        %268 = vmatpush2.msra.mxu0 0.0
        %269 = vmatprep.subr.mxu0 0.0
        %270 = vmatpush2.msra.mxu0 0.0
        %271 = vmatprep.subr.mxu0 0.0
        %272 = vmatpush2.msra.mxu0 0.0
        %273 = vmatprep.subr.mxu0 0.0
        %274 = vmatpush2.msra.mxu0 0.0
        %275 = vmatprep.subr.mxu0 0.0
        %276 = vmatpush2.msra.mxu0 0.0
        %277 = vmatprep.subr.mxu0 0.0
        %278 = vmatpush2.msra.mxu0 0.0
        %279 = vmatprep.subr.mxu0 0.0
        %280 = vmatpush2.msra.mxu0 0.0
        %281 = vmatprep.subr.mxu0 0.0
        %282 = vmatpush2.msra.mxu0 0.0
        %283 = vmatprep.subr.mxu0 0.0
        %284 = vmatpush2.msra.mxu0 0.0
        %285 = vmatprep.subr.mxu0 0.0
        %286 = vmatpush2.msra.mxu0 0.0
        %287 = vmatprep.mubr.f32.mxu0 0.0
        %288 = vmatmul.mubr.f32.gmra.mxu0 %v221
        %v289 = vpop.f32.mrf.mxu0
        %v290 = vadd.f32 %v218, %v289
        %v291 = vpop.f32.mrf.mxu0
        %292 = vdwg.mxu0
        %293 = vst.msk [vmem:[%s212] sm:$0xff] %vm219, %v290
        %s294 = sand.u32 %s97, 1
        %s295 = scalar_lea.sflag [#allocation4], %s294
        %s296 = sand.u32 %s97, 1
        %s297 = smul.addr %s296, 8
        %s298 = scalar_lea.vmem [#allocation8], %s297
        // Predicated region
        $region45: #{tpu_custom_call.1} parent=31 // pred_check
          %p299 = pneg %p107
        $region46: #{tpu_custom_call.1} parent=31 // pred_check_branch
          %301 = sbr.rel (%p299) target = $region48
        $region47: #{tpu_custom_call.1} parent=31 // pred_region
          %s303 = ssub.s32 128, 128
          %304 = vsyncadd %s295, %s303
          %s305 = smul.addr %s21, 128
          %s306 = scalar_lea.hbm %s3, %s305
          %s308 = sshll.u32 %s298, 4
          %s309 = int_to_ptr.vmem [resolvable:$true] %s308
          %311 = dma.vmem_to_hbm [thread:$0]  %s309, 128, %s306, %s295
        $region48: #{tpu_custom_call.1} parent=31 // pred_fallthru
          _
      $region32: #{tpu_custom_call.1} parent=5 // pred_fallthru
        _
      %p312 = scmp.le.s32.totalorder 2, %s16
      // Predicated region
      $region49: #{tpu_custom_call.1} parent=5 // pred_check
        %p313 = pneg %p312
      $region50: #{tpu_custom_call.1} parent=5 // pred_check_branch
        %315 = sbr.rel (%p313) target = $region52
      $region51: #{tpu_custom_call.1} parent=5 // pred_region
        %s316 = ssub.s32 %s16, 2
        // Predicated region
        $region53: #{tpu_custom_call.1} parent=51 // pred_check
          %p317 = pneg %p113
        $region54: #{tpu_custom_call.1} parent=51 // pred_check_branch
          %319 = sbr.rel (%p317) target = $region56
        $region55: #{tpu_custom_call.1} parent=51 // pred_region
          %s320 = sand.u32 %s98, 1
          %s321 = scalar_lea.sflag [#allocation4], %s320
          %s322 = sand.u32 %s98, 1
          %s323 = smul.addr %s322, 8
          %s324 = scalar_lea.vmem [#allocation8], %s323
          %325 = dma.done %s321, 128
        $region56: #{tpu_custom_call.1} parent=51 // pred_fallthru
          _
      $region52: #{tpu_custom_call.1} parent=5 // pred_fallthru
        _
    $region6: #{tpu_custom_call.1} parent=1 // loop_footer
      %s20 = sadd.s32 1, %s16
    $region7: #{tpu_custom_call.1} parent=1 // loop_footer_branch
      %15 = sbr.rel target = $region3
    $region8: #{tpu_custom_call.1} parent=1 // loop_exit
      _
    %326 = vsyncpa [#allocation3], 1
    %s327 = scalar_lea.sflag [#allocation3], 1
    %328 = vsyncpa %s327, 1
    %329 = vsyncpa [#allocation6], 1
    %330 = vsyncpa [#allocation4], 1
    %s331 = scalar_lea.sflag [#allocation4], 1
    %332 = vsyncpa %s331, 1

</llo_original>
